<compile_context>
chip_gen: v7x
topology: tpu7x:2x2x1
jax: 0.10.0
libtpu: 0.0.40
codegen_flags: <defaults>
</compile_context>

<pallas_src>
import functools

import jax
import jax.numpy as jnp
from jax.experimental import pallas as pl
from jax.experimental.pallas import tpu as pltpu


def _round_up(x, m):
    return ((x + m - 1) // m) * m


def _vmem_capacity_bytes():
    """Generation-aware VMEM capacity; conservative v7x fallback (64 MiB/core)."""
    try:
        return int(pltpu.get_tpu_info().vmem_capacity_bytes)
    except Exception:
        return 64 * 1024 * 1024


def _plan_tiles(m, hp):
    """Pick the row tile TM and the scoped-VMEM limit.

    Accounts for the VMEM-resident bf16 weights (single-buffered), the
    double-buffered f32 row tiles and the (TM, 4Hp) f32 gates temporary so the
    footprint fits v5e/v6e (128 MiB) and v7x (64 MiB) alike."""
    cap = _vmem_capacity_bytes()
    w_bytes = 2 * hp * (4 * hp) * 2          # W_ih^T + W_hh^T, bf16, 1 buffer each
    fixed = w_bytes + 4 * hp * 4             # + fused f32 bias
    per_row = (
        2 * 5 * hp * 4                       # x, h, c, h', c' f32 tiles, double-buffered
        + 2 * hp * 2                         # in-kernel bf16 casts of the x / h tiles
        + 2 * 4 * hp * 4                     # gates + gate-activation temporaries
    )
    budget = int(cap * 0.55)                 # headroom for compiler scratch
    tm = (budget - fixed) // per_row
    tm = min(tm, 1024, _round_up(m, 8))      # big lane-dense tiles ~85% of HBM roofline
    split = _round_up((m + 1) // 2, 8)       # >=2 row tiles keeps both v7x TCs busy
    if split >= 256:
        tm = min(tm, split)
    tm = max(8, (tm // 8) * 8)
    need = fixed + tm * per_row
    vmem_limit = int(min(cap * 3 // 4, max(need * 3 // 2, 32 * 1024 * 1024)))
    return tm, vmem_limit


def _lstm_cell_kernel(x_ref, h_ref, c_ref, w_ih_ref, w_hh_ref, b_ref,
                      h_out_ref, c_out_ref):
    hp = c_ref.shape[-1]

    # Two accumulating MXU matmuls straight from the (TM, Hp) x / h tiles — no
    # fused [x|h] slab is ever materialised in HBM.  Operands are cast to bf16
    # in VMEM (VPU, no extra HBM traffic); weights arrive bf16; accumulate f32.
    gates = (
        jnp.dot(x_ref[...].astype(jnp.bfloat16), w_ih_ref[...],
                preferred_element_type=jnp.float32)
        + jnp.dot(h_ref[...].astype(jnp.bfloat16), w_hh_ref[...],
                  preferred_element_type=jnp.float32)
        + b_ref[...])

    def sig(z):
        # sigmoid(z) == 0.5*(tanh(z/2)+1): one EUP transcendental per element.
        return 0.5 * (jnp.tanh(0.5 * z) + 1.0)

    i_g = sig(gates[:, 0 * hp:1 * hp])        # lane-aligned slices (hp % 128 == 0)
    f_g = sig(gates[:, 1 * hp:2 * hp])
    g_g = jnp.tanh(gates[:, 2 * hp:3 * hp])
    o_g = sig(gates[:, 3 * hp:4 * hp])

    c_new = f_g * c_ref[...] + i_g * g_g
    h_out_ref[...] = o_g * jnp.tanh(c_new)
    c_out_ref[...] = c_new


def lstm_cell_pallas(x, h, c, w_ih_t, w_hh_t, bias, *, tm, vmem_limit):
    """x, h, c: (Mp, Hp) f32; w_*_t: (Hp, 4Hp) bf16; bias: (1, 4Hp) f32.
    Requires Mp % tm == 0 and Hp % 128 == 0.  Returns (h', c'), each (Mp, Hp) f32."""
    mp, hp = c.shape
    row = pl.BlockSpec((tm, hp), lambda i: (i, 0))
    resident = dict(pipeline_mode=pl.Buffered(1))   # constant index_map: one buffer
    return pl.pallas_call(
        _lstm_cell_kernel,
        out_shape=(jax.ShapeDtypeStruct((mp, hp), jnp.float32),
                   jax.ShapeDtypeStruct((mp, hp), jnp.float32)),
        grid=(mp // tm,),
        in_specs=[
            row,                                                        # x tile
            row,                                                        # h tile
            row,                                                        # c tile
            pl.BlockSpec((hp, 4 * hp), lambda i: (0, 0), **resident),   # W_ih^T resident
            pl.BlockSpec((hp, 4 * hp), lambda i: (0, 0), **resident),   # W_hh^T resident
            pl.BlockSpec((1, 4 * hp), lambda i: (0, 0), **resident),    # fused bias
        ],
        out_specs=(row, row),
        input_output_aliases={2: 1},   # write c' in place over the padded c input
        compiler_params=pltpu.CompilerParams(
            dimension_semantics=("parallel",),   # row tiles split across v7x's 2 TCs
            vmem_limit_bytes=vmem_limit),
    )(x, h, c, w_ih_t, w_hh_t, bias)


def _state_rows(s, b, a, m, mp, hp):
    """Bring a state operand to the padded (Mp, Hp) kernel layout.
    `s` is either an explicit (B, A, hd) override or the persistently stored
    (A, Hp) padded state (broadcast over batch, matching the module)."""
    if s.ndim == 3:
        hd = s.shape[-1]
        s = jnp.pad(s.reshape(-1, hd), ((0, 0), (0, hp - hd)))
    if s.shape[0] != m:
        s = jnp.broadcast_to(s.reshape(1, a, hp), (b, a, hp)).reshape(m, hp)
    return jnp.pad(s, ((0, mp - m), (0, 0)))


@functools.partial(jax.jit, static_argnames=("hp", "tm", "vmem_limit"))
def _rnn_step(x, h_in, c_in, w_ih_t, w_hh_t, bias, *, hp, tm, vmem_limit):
    b, a, hd = x.shape
    m = b * a
    mp = _round_up(m, tm)
    x_p = jnp.pad(x.reshape(m, hd), ((0, mp - m), (0, hp - hd)))
    h_p = _state_rows(h_in, b, a, m, mp, hp)
    c_p = _state_rows(c_in, b, a, m, mp, hp)
    h_new, c_new = lstm_cell_pallas(x_p, h_p, c_p, w_ih_t, w_hh_t, bias,
                                    tm=tm, vmem_limit=vmem_limit)
    h_out = h_new[:m, :hd].reshape(b, a, hd)          # API-shaped results
    c_out = c_new[:m, :hd].reshape(b, a, hd)
    return h_out, c_out, h_new[:m], c_new[:m]         # last two: padded kernel layout


class RNNModelPallas:
    """JAX/Pallas port of RNN_Model: one shared LSTMCell step applied per agent.
    Recurrent state is kept between calls in the padded (A, Hp) kernel layout so
    repeated batch-1 steps never re-pad / re-slice it through HBM."""

    def __init__(self, hidden_dim, num_agents, key):
        self.hidden_dim = hidden_dim
        self.num_agents = num_agents
        hd = hidden_dim
        self.hp = _round_up(max(hd, 128), 128)   # lane-aligned padded hidden dim

        k = 1.0 / jnp.sqrt(jnp.float32(hd))
        ks = jax.random.split(key, 4)
        # PyTorch nn.LSTMCell parameter layout, gate order (i, f, g, o).
        self.w_ih = jax.random.uniform(ks[0], (4 * hd, hd), jnp.float32, -k, k)
        self.w_hh = jax.random.uniform(ks[1], (4 * hd, hd), jnp.float32, -k, k)
        self.b_ih = jax.random.uniform(ks[2], (4 * hd,), jnp.float32, -k, k)
        self.b_hh = jax.random.uniform(ks[3], (4 * hd,), jnp.float32, -k, k)

        # One-time weight prep: transpose to (H, 4H), pad each gate block to Hp,
        # cast to bf16 (half the weight HBM/VMEM traffic, native MXU rate).
        self.w_ih_t = self._pad_w(self.w_ih).astype(jnp.bfloat16)
        self.w_hh_t = self._pad_w(self.w_hh).astype(jnp.bfloat16)
        bias = (self.b_ih + self.b_hh).reshape(4, hd)
        self.bias = jnp.pad(bias, ((0, 0), (0, self.hp - hd))).reshape(1, 4 * self.hp)

        # Persistent hidden state in padded kernel layout (module keeps (1, A, H)).
        self.h_pad = jnp.zeros((num_agents, self.hp), jnp.float32)
        self.c_pad = jnp.zeros((num_agents, self.hp), jnp.float32)
        self._plan_cache = {}

    def _pad_w(self, w):                       # (4H, H) torch layout -> (Hp, 4Hp)
        hd, hp = self.hidden_dim, self.hp
        w3 = w.T.reshape(hd, 4, hd)            # per-gate padding keeps gate slices aligned
        w3 = jnp.pad(w3, ((0, hp - hd), (0, 0), (0, hp - hd)))
        return w3.reshape(hp, 4 * hp)

    def _plan(self, m):
        if m not in self._plan_cache:
            self._plan_cache[m] = _plan_tiles(m, self.hp)
        return self._plan_cache[m]

    def forward(self, x, h=None, c=None):
        x = jnp.asarray(x, jnp.float32)
        b, a, hd = x.shape
        h_in = self.h_pad if h is None else jnp.asarray(h, jnp.float32)
        c_in = self.c_pad if c is None else jnp.asarray(c, jnp.float32)
        tm, vmem_limit = self._plan(b * a)
        h_out, c_out, h_state, c_state = _rnn_step(
            x, h_in, c_in, self.w_ih_t, self.w_hh_t, self.bias,
            hp=self.hp, tm=tm, vmem_limit=vmem_limit)
        if b == 1:                             # matches the module's B==1 state update
            self.h_pad = h_state
            self.c_pad = c_state
        return h_out, c_out

    def get_hidden_state(self):
        hd, a = self.hidden_dim, self.num_agents
        h = self.h_pad[:, :hd].reshape(1, a, hd)
        c = self.c_pad[:, :hd].reshape(1, a, hd)
        return (jax.device_get(h), jax.device_get(c))


def _reference_lstm_cell(x2, h2, c2, w_ih, w_hh, b_ih, b_hh):
    gates = x2 @ w_ih.T + b_ih + h2 @ w_hh.T + b_hh
    hd = x2.shape[-1]
    i = jax.nn.sigmoid(gates[:, :hd])
    f = jax.nn.sigmoid(gates[:, hd:2 * hd])
    g = jnp.tanh(gates[:, 2 * hd:3 * hd])
    o = jax.nn.sigmoid(gates[:, 3 * hd:])
    c_new = f * c2 + i * g
    h_new = o * jnp.tanh(c_new)
    return h_new, c_new


if __name__ == "__main__":
    key = jax.random.PRNGKey(0)
    k_model, k_x, k_h, k_c, k_xa, k_xb = jax.random.split(key, 6)

    batch, num_agents, hidden_dim = 2, 4, 32
    TOL = 2e-2          # bf16 matmul operands with f32 accumulation vs f32 reference
    model = RNNModelPallas(hidden_dim, num_agents, k_model)
    x = jax.random.normal(k_x, (batch, num_agents, hidden_dim), jnp.float32)

    # step 1: default (zero) state
    h_out, c_out = model.forward(x)
    jax.block_until_ready((h_out, c_out))
    assert h_out.shape == x.shape and c_out.shape == x.shape
    zeros = jnp.zeros((batch * num_agents, hidden_dim), jnp.float32)
    h_ref, c_ref = _reference_lstm_cell(
        x.reshape(-1, hidden_dim), zeros, zeros,
        model.w_ih, model.w_hh, model.b_ih, model.b_hh)
    assert jnp.allclose(h_out.reshape(-1, hidden_dim), h_ref, atol=TOL)
    assert jnp.allclose(c_out.reshape(-1, hidden_dim), c_ref, atol=TOL)

    # step 2: explicit nonzero state (exercises the recurrent h @ W_hh path)
    h_in = jax.random.normal(k_h, (batch, num_agents, hidden_dim), jnp.float32)
    c_in = jax.random.normal(k_c, (batch, num_agents, hidden_dim), jnp.float32)
    h_out2, c_out2 = model.forward(x, h_in, c_in)
    jax.block_until_ready((h_out2, c_out2))
    h_ref2, c_ref2 = _reference_lstm_cell(
        x.reshape(-1, hidden_dim), h_in.reshape(-1, hidden_dim),
        c_in.reshape(-1, hidden_dim),
        model.w_ih, model.w_hh, model.b_ih, model.b_hh)
    assert jnp.allclose(h_out2.reshape(-1, hidden_dim), h_ref2, atol=TOL)
    assert jnp.allclose(c_out2.reshape(-1, hidden_dim), c_ref2, atol=TOL)

    # steps 3+4: batch==1 path, exercising the persistent padded-state layout
    xa = jax.random.normal(k_xa, (1, num_agents, hidden_dim), jnp.float32)
    xb = jax.random.normal(k_xb, (1, num_agents, hidden_dim), jnp.float32)
    h3, c3 = model.forward(xa)              # stored state is still zero here
    h4, c4 = model.forward(xb)              # consumes the state stored by step 3
    jax.block_until_ready((h4, c4))
    z1 = jnp.zeros((num_agents, hidden_dim), jnp.float32)
    h3_ref, c3_ref = _reference_lstm_cell(
        xa.reshape(-1, hidden_dim), z1, z1,
        model.w_ih, model.w_hh, model.b_ih, model.b_hh)
    h4_ref, c4_ref = _reference_lstm_cell(
        xb.reshape(-1, hidden_dim), h3_ref, c3_ref,
        model.w_ih, model.w_hh, model.b_ih, model.b_hh)
    assert jnp.allclose(h4.reshape(-1, hidden_dim), h4_ref, atol=TOL)
    assert jnp.allclose(c4.reshape(-1, hidden_dim), c4_ref, atol=TOL)
    sh, sc = model.get_hidden_state()
    assert sh.shape == (1, num_agents, hidden_dim)
    assert sc.shape == (1, num_agents, hidden_dim)

    print("KERNEL_OK")
</pallas_src>

<mosaic_0001>
module attributes {stable_mosaic.version = 11 : i64} {
  func.func @_lstm_cell_kernel(%arg0: i32, %arg1: memref<8x128xf32, #tpu.memory_space<vmem>>, %arg2: memref<8x128xf32, #tpu.memory_space<vmem>>, %arg3: memref<8x128xf32, #tpu.memory_space<vmem>>, %arg4: memref<128x512xbf16, #tpu.memory_space<vmem>>, %arg5: memref<128x512xbf16, #tpu.memory_space<vmem>>, %arg6: memref<1x512xf32, #tpu.memory_space<vmem>>, %arg7: memref<8x128xf32, #tpu.memory_space<vmem>>, %arg8: memref<8x128xf32, #tpu.memory_space<vmem>>) attributes {dimension_semantics = [#tpu.dimension_semantics<parallel>], iteration_bounds = array<i64: 1>, scalar_prefetch = 0 : i64, scratch_operands = 0 : i64, tpu.core_type = #tpu.core_type<tc>, window_params = [{transform_indices = @transform_0, window_bounds = array<i64: 8, 128>}, {transform_indices = @transform_1, window_bounds = array<i64: 8, 128>}, {transform_indices = @transform_2, window_bounds = array<i64: 8, 128>}, {pipeline_mode = #tpu.pipeline_mode<synchronous>, transform_indices = @transform_3, window_bounds = array<i64: 128, 512>}, {pipeline_mode = #tpu.pipeline_mode<synchronous>, transform_indices = @transform_4, window_bounds = array<i64: 128, 512>}, {pipeline_mode = #tpu.pipeline_mode<synchronous>, transform_indices = @transform_5, window_bounds = array<i64: 1, 512>}, {transform_indices = @transform_6, window_bounds = array<i64: 8, 128>}, {transform_indices = @transform_7, window_bounds = array<i64: 8, 128>}]} {
    %c0 = arith.constant 0 : index
    %c0_0 = arith.constant 0 : index
    %0 = vector.load %arg1[%c0, %c0_0] : memref<8x128xf32, #tpu.memory_space<vmem>>, vector<8x128xf32>
    %1 = arith.truncf %0 : vector<8x128xf32> to vector<8x128xbf16>
    %c0_1 = arith.constant 0 : index
    %c0_2 = arith.constant 0 : index
    %2 = vector.load %arg4[%c0_1, %c0_2] : memref<128x512xbf16, #tpu.memory_space<vmem>>, vector<128x512xbf16>
    %cst = arith.constant dense<0.000000e+00> : vector<8x512xf32>
    %3 = tpu.matmul %1, %2, %cst {dimension_numbers = #tpu.dot_dimension_numbers<[1], [0], [0], [1], [0, 0, 1, 1], [], []>} : vector<8x128xbf16>, vector<128x512xbf16>, vector<8x512xf32> -> vector<8x512xf32>
    %c0_3 = arith.constant 0 : index
    %c0_4 = arith.constant 0 : index
    %4 = vector.load %arg2[%c0_3, %c0_4] : memref<8x128xf32, #tpu.memory_space<vmem>>, vector<8x128xf32>
    %5 = arith.truncf %4 : vector<8x128xf32> to vector<8x128xbf16>
    %c0_5 = arith.constant 0 : index
    %c0_6 = arith.constant 0 : index
    %6 = vector.load %arg5[%c0_5, %c0_6] : memref<128x512xbf16, #tpu.memory_space<vmem>>, vector<128x512xbf16>
    %cst_7 = arith.constant dense<0.000000e+00> : vector<8x512xf32>
    %7 = tpu.matmul %5, %6, %cst_7 {dimension_numbers = #tpu.dot_dimension_numbers<[1], [0], [0], [1], [0, 0, 1, 1], [], []>} : vector<8x128xbf16>, vector<128x512xbf16>, vector<8x512xf32> -> vector<8x512xf32>
    %8 = arith.addf %3, %7 : vector<8x512xf32>
    %c0_8 = arith.constant 0 : index
    %c0_9 = arith.constant 0 : index
    %9 = vector.load %arg6[%c0_8, %c0_9] : memref<1x512xf32, #tpu.memory_space<vmem>>, vector<1x512xf32>
    %10 = vector.broadcast %9 : vector<1x512xf32> to vector<8x512xf32>
    %11 = arith.addf %8, %10 : vector<8x512xf32>
    %12 = vector.extract_strided_slice %11 {offsets = [0, 0], sizes = [8, 128], strides = [1, 1]} : vector<8x512xf32> to vector<8x128xf32>
    %cst_10 = arith.constant 5.000000e-01 : f32
    %13 = vector.broadcast %cst_10 : f32 to vector<8x128xf32>
    %14 = arith.mulf %13, %12 : vector<8x128xf32>
    %15 = math.tanh %14 : vector<8x128xf32>
    %cst_11 = arith.constant 1.000000e+00 : f32
    %16 = vector.broadcast %cst_11 : f32 to vector<8x128xf32>
    %17 = arith.addf %15, %16 : vector<8x128xf32>
    %cst_12 = arith.constant 5.000000e-01 : f32
    %18 = vector.broadcast %cst_12 : f32 to vector<8x128xf32>
    %19 = arith.mulf %18, %17 : vector<8x128xf32>
    %20 = vector.extract_strided_slice %11 {offsets = [0, 128], sizes = [8, 128], strides = [1, 1]} : vector<8x512xf32> to vector<8x128xf32>
    %cst_13 = arith.constant 5.000000e-01 : f32
    %21 = vector.broadcast %cst_13 : f32 to vector<8x128xf32>
    %22 = arith.mulf %21, %20 : vector<8x128xf32>
    %23 = math.tanh %22 : vector<8x128xf32>
    %cst_14 = arith.constant 1.000000e+00 : f32
    %24 = vector.broadcast %cst_14 : f32 to vector<8x128xf32>
    %25 = arith.addf %23, %24 : vector<8x128xf32>
    %cst_15 = arith.constant 5.000000e-01 : f32
    %26 = vector.broadcast %cst_15 : f32 to vector<8x128xf32>
    %27 = arith.mulf %26, %25 : vector<8x128xf32>
    %28 = vector.extract_strided_slice %11 {offsets = [0, 256], sizes = [8, 128], strides = [1, 1]} : vector<8x512xf32> to vector<8x128xf32>
    %29 = math.tanh %28 : vector<8x128xf32>
    %30 = vector.extract_strided_slice %11 {offsets = [0, 384], sizes = [8, 128], strides = [1, 1]} : vector<8x512xf32> to vector<8x128xf32>
    %cst_16 = arith.constant 5.000000e-01 : f32
    %31 = vector.broadcast %cst_16 : f32 to vector<8x128xf32>
    %32 = arith.mulf %31, %30 : vector<8x128xf32>
    %33 = math.tanh %32 : vector<8x128xf32>
    %cst_17 = arith.constant 1.000000e+00 : f32
    %34 = vector.broadcast %cst_17 : f32 to vector<8x128xf32>
    %35 = arith.addf %33, %34 : vector<8x128xf32>
    %cst_18 = arith.constant 5.000000e-01 : f32
    %36 = vector.broadcast %cst_18 : f32 to vector<8x128xf32>
    %37 = arith.mulf %36, %35 : vector<8x128xf32>
    %c0_19 = arith.constant 0 : index
    %c0_20 = arith.constant 0 : index
    %38 = vector.load %arg3[%c0_19, %c0_20] : memref<8x128xf32, #tpu.memory_space<vmem>>, vector<8x128xf32>
    %39 = arith.mulf %27, %38 : vector<8x128xf32>
    %40 = arith.mulf %19, %29 : vector<8x128xf32>
    %41 = arith.addf %39, %40 : vector<8x128xf32>
    %42 = math.tanh %41 : vector<8x128xf32>
    %43 = arith.mulf %37, %42 : vector<8x128xf32>
    %c0_21 = arith.constant 0 : index
    %c0_22 = arith.constant 0 : index
    %44 = vector.load %arg7[%c0_21, %c0_22] : memref<8x128xf32, #tpu.memory_space<vmem>>, vector<8x128xf32>
    tpu.vector_store %arg7[%c0_21, %c0_22], %43 {strides = array<i32>} : memref<8x128xf32, #tpu.memory_space<vmem>>, vector<8x128xf32>,
    %c0_23 = arith.constant 0 : index
    %c0_24 = arith.constant 0 : index
    %45 = vector.load %arg8[%c0_23, %c0_24] : memref<8x128xf32, #tpu.memory_space<vmem>>, vector<8x128xf32>
    tpu.vector_store %arg8[%c0_23, %c0_24], %41 {strides = array<i32>} : memref<8x128xf32, #tpu.memory_space<vmem>>, vector<8x128xf32>,
    return
  }
  func.func @transform_0(%arg0: i32) -> (i32, i32) {
    %c0_i32 = arith.constant 0 : i32
    %c0_i32_0 = arith.constant 0 : i32
    return %arg0, %c0_i32 : i32, i32
  }
  func.func @transform_1(%arg0: i32) -> (i32, i32) {
    %c0_i32 = arith.constant 0 : i32
    %c0_i32_0 = arith.constant 0 : i32
    return %arg0, %c0_i32 : i32, i32
  }
  func.func @transform_2(%arg0: i32) -> (i32, i32) {
    %c0_i32 = arith.constant 0 : i32
    %c0_i32_0 = arith.constant 0 : i32
    return %arg0, %c0_i32 : i32, i32
  }
  func.func @transform_3(%arg0: i32) -> (i32, i32) {
    %c0_i32 = arith.constant 0 : i32
    %c0_i32_0 = arith.constant 0 : i32
    %c0_i32_1 = arith.constant 0 : i32
    return %c0_i32, %c0_i32_0 : i32, i32
  }
  func.func @transform_4(%arg0: i32) -> (i32, i32) {
    %c0_i32 = arith.constant 0 : i32
    %c0_i32_0 = arith.constant 0 : i32
    %c0_i32_1 = arith.constant 0 : i32
    return %c0_i32, %c0_i32_0 : i32, i32
  }
  func.func @transform_5(%arg0: i32) -> (i32, i32) {
    %c0_i32 = arith.constant 0 : i32
    %c0_i32_0 = arith.constant 0 : i32
    %c0_i32_1 = arith.constant 0 : i32
    return %c0_i32, %c0_i32_0 : i32, i32
  }
  func.func @transform_6(%arg0: i32) -> (i32, i32) {
    %c0_i32 = arith.constant 0 : i32
    %c0_i32_0 = arith.constant 0 : i32
    return %arg0, %c0_i32 : i32, i32
  }
  func.func @transform_7(%arg0: i32) -> (i32, i32) {
    %c0_i32 = arith.constant 0 : i32
    %c0_i32_0 = arith.constant 0 : i32
    return %arg0, %c0_i32 : i32, i32
  }
}

</mosaic_0001>

<llo_original>
// kernel: _rnn_step.1
$region0: #{_rnn_step.1}
  #allocation0 [shape = 'u32[]', space=smem, size = 0x4, offset = 0x4, fixed_abs, tag = 'smem constant byte address 0x4 - core index']
  #allocation1 [shape = 'u32[144,128]{1,0:T(1,128)}', space=vmem, size = 0x12000, scoped, tag = 'internal scratch']
  %s0 = inlined_call_operand.vmem [shape: f32[8,128], index: 0, kind: input, shape index: {}]
  %s1 = inlined_call_operand.vmem [shape: f32[8,128], index: 1, kind: input, shape index: {}]
  %s2 = inlined_call_operand.vmem [shape: f32[8,128], index: 2, kind: input, shape index: {}, may-alias: {2,7}]
  %s3 = inlined_call_operand.hbm [shape: bf16[128,512], index: 3, kind: input, shape index: {}]
  %s4 = inlined_call_operand.hbm [shape: bf16[128,512], index: 4, kind: input, shape index: {}]
  %s5 = inlined_call_operand.vmem [shape: f32[1,512], index: 5, kind: input, shape index: {}]
  %s6 = inlined_call_operand.vmem [shape: f32[8,128], index: 6, kind: output, shape index: {0}]
  %s7 = inlined_call_operand.vmem [shape: f32[8,128], index: 7, kind: output, shape index: {1}, may-alias: {2,7}]
  %8 = xla_tuple %s6, %s7
  %s9 = sld [smem:[#allocation0]]
  $region50: #{_rnn_step.1} parent=0
    _
  %s11 = ssub.s32 1, %s9
  %s12 = scalar_select 0, %s11, %s9
  $region1: #{_rnn_step.1} parent=0
    #allocation2 [shape = 'u8[131072]{0}', space=vmem, size = 0x20000, scoped, tag = 'input window, operand 3, single buffered']
    #allocation3 [shape = 's32[1]{0}', space=sflag, size = 0x4, scoped, tag = 'scoped memory for _rnn_step.1']
    #allocation4 [shape = 'u8[131072]{0}', space=vmem, size = 0x20000, scoped, tag = 'input window, operand 4, single buffered']
    #allocation5 [shape = 's32[1]{0}', space=sflag, size = 0x4, scoped, tag = 'scoped memory for _rnn_step.1']
    %13 = vsyncpa [#allocation3], 0
    %14 = vsyncpa [#allocation5], 0
    // Predicated region
    $region2: #{_rnn_step.1} parent=1 // pred_check
      _
    $region3: #{_rnn_step.1} parent=1 // pred_check_branch
      %16 = sbr.rel (0) target = $region5
    $region4: #{_rnn_step.1} parent=1 // pred_region
      _
    $region5: #{_rnn_step.1} parent=1 // pred_fallthru
      _
    // Predicated region
    $region6: #{_rnn_step.1} parent=1 // pred_check
      _
    $region7: #{_rnn_step.1} parent=1 // pred_check_branch
      %18 = sbr.rel (0) target = $region9
    $region8: #{_rnn_step.1} parent=1 // pred_region
      _
    $region9: #{_rnn_step.1} parent=1 // pred_fallthru
      _
    // Predicated region
    $region10: #{_rnn_step.1} parent=1 // pred_check
      _
    $region11: #{_rnn_step.1} parent=1 // pred_check_branch
      %20 = sbr.rel (0) target = $region13
    $region12: #{_rnn_step.1} parent=1 // pred_region
      _
    $region13: #{_rnn_step.1} parent=1 // pred_fallthru
      _
    // Predicated region
    $region14: #{_rnn_step.1} parent=1 // pred_check
      _
    $region15: #{_rnn_step.1} parent=1 // pred_check_branch
      %22 = sbr.rel (0) target = $region17
    $region16: #{_rnn_step.1} parent=1 // pred_region
      %s24 = ssub.s32 4096, 4096
      %25 = vsyncadd [#allocation3], %s24
      %s26 = sshll.u32 [#allocation2], 4
      %s27 = int_to_ptr.vmem [resolvable:$true] %s26
      %32 = dma.hbm_to_vmem [thread:$0]  %s3, 4096, %s27, [#allocation3], 256, 256, 16
    $region17: #{_rnn_step.1} parent=1 // pred_fallthru
      _
    // Predicated region
    $region18: #{_rnn_step.1} parent=1 // pred_check
      _
    $region19: #{_rnn_step.1} parent=1 // pred_check_branch
      %34 = sbr.rel (0) target = $region21
    $region20: #{_rnn_step.1} parent=1 // pred_region
      %s36 = ssub.s32 4096, 4096
      %37 = vsyncadd [#allocation5], %s36
      %s38 = sshll.u32 [#allocation4], 4
      %s39 = int_to_ptr.vmem [resolvable:$true] %s38
      %44 = dma.hbm_to_vmem [thread:$0]  %s4, 4096, %s39, [#allocation5], 256, 256, 16
    $region21: #{_rnn_step.1} parent=1 // pred_fallthru
      _
    // Predicated region
    $region22: #{_rnn_step.1} parent=1 // pred_check
      _
    $region23: #{_rnn_step.1} parent=1 // pred_check_branch
      %46 = sbr.rel (0) target = $region25
    $region24: #{_rnn_step.1} parent=1 // pred_region
      _
    $region25: #{_rnn_step.1} parent=1 // pred_fallthru
      _
    // Predicated region
    $region26: #{_rnn_step.1} parent=1 // pred_check
      _
    $region27: #{_rnn_step.1} parent=1 // pred_check_branch
      %48 = sbr.rel (0) target = $region29
    $region28: #{_rnn_step.1} parent=1 // pred_region
      %49 = dma.done [#allocation3], 4096
    $region29: #{_rnn_step.1} parent=1 // pred_fallthru
      _
    // Predicated region
    $region30: #{_rnn_step.1} parent=1 // pred_check
      _
    $region31: #{_rnn_step.1} parent=1 // pred_check_branch
      %51 = sbr.rel (0) target = $region33
    $region32: #{_rnn_step.1} parent=1 // pred_region
      %52 = dma.done [#allocation5], 4096
    $region33: #{_rnn_step.1} parent=1 // pred_fallthru
      _
    %v54 = vld [vmem:[%s0] sm:$0xff]
    %v55 = vpack.c.bf16 %v54, %v54
    %v56 = vld [vmem:[#allocation2] sm:$0xff]
    %v57 = vld [vmem:[#allocation2 + $0x8] sm:$0xff]
    %v58 = vld [vmem:[#allocation2 + $0x10] sm:$0xff]
    %v59 = vld [vmem:[#allocation2 + $0x18] sm:$0xff]
    %v60 = vld [vmem:[#allocation2 + $0x20] sm:$0xff]
    %v61 = vld [vmem:[#allocation2 + $0x28] sm:$0xff]
    %v62 = vld [vmem:[#allocation2 + $0x30] sm:$0xff]
    %v63 = vld [vmem:[#allocation2 + $0x38] sm:$0xff]
    %v64 = vld [vmem:[#allocation2 + $0x40] sm:$0xff]
    %v65 = vld [vmem:[#allocation2 + $0x48] sm:$0xff]
    %v66 = vld [vmem:[#allocation2 + $0x50] sm:$0xff]
    %v67 = vld [vmem:[#allocation2 + $0x58] sm:$0xff]
    %v68 = vld [vmem:[#allocation2 + $0x60] sm:$0xff]
    %v69 = vld [vmem:[#allocation2 + $0x68] sm:$0xff]
    %v70 = vld [vmem:[#allocation2 + $0x70] sm:$0xff]
    %v71 = vld [vmem:[#allocation2 + $0x78] sm:$0xff]
    %v72 = vld [vmem:[#allocation2 + $0x80] sm:$0xff]
    %v73 = vld [vmem:[#allocation2 + $0x88] sm:$0xff]
    %v74 = vld [vmem:[#allocation2 + $0x90] sm:$0xff]
    %v75 = vld [vmem:[#allocation2 + $0x98] sm:$0xff]
    %v76 = vld [vmem:[#allocation2 + $0xa0] sm:$0xff]
    %v77 = vld [vmem:[#allocation2 + $0xa8] sm:$0xff]
    %v78 = vld [vmem:[#allocation2 + $0xb0] sm:$0xff]
    %v79 = vld [vmem:[#allocation2 + $0xb8] sm:$0xff]
    %v80 = vld [vmem:[#allocation2 + $0xc0] sm:$0xff]
    %v81 = vld [vmem:[#allocation2 + $0xc8] sm:$0xff]
    %v82 = vld [vmem:[#allocation2 + $0xd0] sm:$0xff]
    %v83 = vld [vmem:[#allocation2 + $0xd8] sm:$0xff]
    %v84 = vld [vmem:[#allocation2 + $0xe0] sm:$0xff]
    %v85 = vld [vmem:[#allocation2 + $0xe8] sm:$0xff]
    %v86 = vld [vmem:[#allocation2 + $0xf0] sm:$0xff]
    %v87 = vld [vmem:[#allocation2 + $0xf8] sm:$0xff]
    %v88 = vld [vmem:[%s1] sm:$0xff]
    %v89 = vpack.c.bf16 %v88, %v88
    %v90 = vld [vmem:[#allocation4] sm:$0xff]
    %v91 = vld [vmem:[#allocation4 + $0x8] sm:$0xff]
    %v92 = vld [vmem:[#allocation4 + $0x10] sm:$0xff]
    %v93 = vld [vmem:[#allocation4 + $0x18] sm:$0xff]
    %v94 = vld [vmem:[#allocation4 + $0x20] sm:$0xff]
    %v95 = vld [vmem:[#allocation4 + $0x28] sm:$0xff]
    %v96 = vld [vmem:[#allocation4 + $0x30] sm:$0xff]
    %v97 = vld [vmem:[#allocation4 + $0x38] sm:$0xff]
    %v98 = vld [vmem:[#allocation4 + $0x40] sm:$0xff]
    %v99 = vld [vmem:[#allocation4 + $0x48] sm:$0xff]
    %v100 = vld [vmem:[#allocation4 + $0x50] sm:$0xff]
    %v101 = vld [vmem:[#allocation4 + $0x58] sm:$0xff]
    %v102 = vld [vmem:[#allocation4 + $0x60] sm:$0xff]
    %v103 = vld [vmem:[#allocation4 + $0x68] sm:$0xff]
    %v104 = vld [vmem:[#allocation4 + $0x70] sm:$0xff]
    %v105 = vld [vmem:[#allocation4 + $0x78] sm:$0xff]
    %v106 = vld [vmem:[#allocation4 + $0x80] sm:$0xff]
    %v107 = vld [vmem:[#allocation4 + $0x88] sm:$0xff]
    %v108 = vld [vmem:[#allocation4 + $0x90] sm:$0xff]
    %v109 = vld [vmem:[#allocation4 + $0x98] sm:$0xff]
    %v110 = vld [vmem:[#allocation4 + $0xa0] sm:$0xff]
    %v111 = vld [vmem:[#allocation4 + $0xa8] sm:$0xff]
    %v112 = vld [vmem:[#allocation4 + $0xb0] sm:$0xff]
    %v113 = vld [vmem:[#allocation4 + $0xb8] sm:$0xff]
    %v114 = vld [vmem:[#allocation4 + $0xc0] sm:$0xff]
    %v115 = vld [vmem:[#allocation4 + $0xc8] sm:$0xff]
    %v116 = vld [vmem:[#allocation4 + $0xd0] sm:$0xff]
    %v117 = vld [vmem:[#allocation4 + $0xd8] sm:$0xff]
    %v118 = vld [vmem:[#allocation4 + $0xe0] sm:$0xff]
    %v119 = vld [vmem:[#allocation4 + $0xe8] sm:$0xff]
    %v120 = vld [vmem:[#allocation4 + $0xf0] sm:$0xff]
    %v121 = vld [vmem:[#allocation4 + $0xf8] sm:$0xff]
    %v154 = vunpack.c.l.b16 %v90
    %v155 = vunpack.c.h.b16 %v90
    %v156 = vunpack.c.l.b16 %v91
    %v157 = vunpack.c.h.b16 %v91
    %v158 = vunpack.c.l.b16 %v92
    %v159 = vunpack.c.h.b16 %v92
    %v160 = vunpack.c.l.b16 %v93
    %v161 = vunpack.c.h.b16 %v93
    %v162 = vunpack.c.l.b16 %v94
    %v163 = vunpack.c.h.b16 %v94
    %v164 = vunpack.c.l.b16 %v95
    %v165 = vunpack.c.h.b16 %v95
    %v166 = vunpack.c.l.b16 %v96
    %v167 = vunpack.c.h.b16 %v96
    %v168 = vunpack.c.l.b16 %v97
    %v169 = vunpack.c.h.b16 %v97
    %v170 = vunpack.c.l.b16 %v98
    %v171 = vunpack.c.h.b16 %v98
    %v172 = vunpack.c.l.b16 %v99
    %v173 = vunpack.c.h.b16 %v99
    %v174 = vunpack.c.l.b16 %v100
    %v175 = vunpack.c.h.b16 %v100
    %v176 = vunpack.c.l.b16 %v101
    %v177 = vunpack.c.h.b16 %v101
    %v178 = vunpack.c.l.b16 %v102
    %v179 = vunpack.c.h.b16 %v102
    %v180 = vunpack.c.l.b16 %v103
    %v181 = vunpack.c.h.b16 %v103
    %v182 = vunpack.c.l.b16 %v104
    %v183 = vunpack.c.h.b16 %v104
    %v184 = vunpack.c.l.b16 %v105
    %v185 = vunpack.c.h.b16 %v105
    %v186 = vunpack.c.l.b16 %v106
    %v187 = vunpack.c.h.b16 %v106
    %v188 = vunpack.c.l.b16 %v107
    %v189 = vunpack.c.h.b16 %v107
    %v190 = vunpack.c.l.b16 %v108
    %v191 = vunpack.c.h.b16 %v108
    %v192 = vunpack.c.l.b16 %v109
    %v193 = vunpack.c.h.b16 %v109
    %v194 = vunpack.c.l.b16 %v110
    %v195 = vunpack.c.h.b16 %v110
    %v196 = vunpack.c.l.b16 %v111
    %v197 = vunpack.c.h.b16 %v111
    %v198 = vunpack.c.l.b16 %v112
    %v199 = vunpack.c.h.b16 %v112
    %v200 = vunpack.c.l.b16 %v113
    %v201 = vunpack.c.h.b16 %v113
    %v202 = vunpack.c.l.b16 %v114
    %v203 = vunpack.c.h.b16 %v114
    %v204 = vunpack.c.l.b16 %v115
    %v205 = vunpack.c.h.b16 %v115
    %v206 = vunpack.c.l.b16 %v116
    %v207 = vunpack.c.h.b16 %v116
    %v208 = vunpack.c.l.b16 %v117
    %v209 = vunpack.c.h.b16 %v117
    %v210 = vunpack.c.l.b16 %v118
    %v211 = vunpack.c.h.b16 %v118
    %v212 = vunpack.c.l.b16 %v119
    %v213 = vunpack.c.h.b16 %v119
    %v214 = vunpack.c.l.b16 %v120
    %v215 = vunpack.c.h.b16 %v120
    %v216 = vunpack.c.l.b16 %v121
    %v217 = vunpack.c.h.b16 %v121
    %v218 = vpack.c.b16 %v158, %v154
    %v219 = vpack.c.b16 %v159, %v155
    %v220 = vpack.c.b16 %v160, %v156
    %v221 = vpack.c.b16 %v161, %v157
    %v222 = vpack.c.b16 %v166, %v162
    %v223 = vpack.c.b16 %v167, %v163
    %v224 = vpack.c.b16 %v168, %v164
    %v225 = vpack.c.b16 %v169, %v165
    %v226 = vpack.c.b16 %v174, %v170
    %v227 = vpack.c.b16 %v175, %v171
    %v228 = vpack.c.b16 %v176, %v172
    %v229 = vpack.c.b16 %v177, %v173
    %v230 = vpack.c.b16 %v182, %v178
    %v231 = vpack.c.b16 %v183, %v179
    %v232 = vpack.c.b16 %v184, %v180
    %v233 = vpack.c.b16 %v185, %v181
    %v234 = vpack.c.b16 %v190, %v186
    %v235 = vpack.c.b16 %v191, %v187
    %v236 = vpack.c.b16 %v192, %v188
    %v237 = vpack.c.b16 %v193, %v189
    %v238 = vpack.c.b16 %v198, %v194
    %v239 = vpack.c.b16 %v199, %v195
    %v240 = vpack.c.b16 %v200, %v196
    %v241 = vpack.c.b16 %v201, %v197
    %v242 = vpack.c.b16 %v206, %v202
    %v243 = vpack.c.b16 %v207, %v203
    %v244 = vpack.c.b16 %v208, %v204
    %v245 = vpack.c.b16 %v209, %v205
    %v246 = vpack.c.b16 %v214, %v210
    %v247 = vpack.c.b16 %v215, %v211
    %v248 = vpack.c.b16 %v216, %v212
    %v249 = vpack.c.b16 %v217, %v213
    %282 = vmatprep.subr.bf16.mxu0 %v219
    %283 = vmatpush1.bf16.msra.mxu0 %v218
    %284 = vmatprep.subr.bf16.mxu0 %v223
    %285 = vmatpush1.bf16.msra.mxu0 %v222
    %286 = vmatprep.subr.bf16.mxu0 %v227
    %287 = vmatpush1.bf16.msra.mxu0 %v226
    %288 = vmatprep.subr.bf16.mxu0 %v231
    %289 = vmatpush1.bf16.msra.mxu0 %v230
    %290 = vmatprep.subr.bf16.mxu0 %v235
    %291 = vmatpush1.bf16.msra.mxu0 %v234
    %292 = vmatprep.subr.bf16.mxu0 %v239
    %293 = vmatpush1.bf16.msra.mxu0 %v238
    %294 = vmatprep.subr.bf16.mxu0 %v243
    %295 = vmatpush1.bf16.msra.mxu0 %v242
    %296 = vmatprep.subr.bf16.mxu0 %v247
    %297 = vmatpush1.bf16.msra.mxu0 %v246
    %298 = vmatprep.subr.bf16.mxu0 0
    %299 = vmatpush1.bf16.msra.mxu0 0
    %300 = vmatprep.subr.bf16.mxu0 0
    %301 = vmatpush1.bf16.msra.mxu0 0
    %302 = vmatprep.subr.bf16.mxu0 0
    %303 = vmatpush1.bf16.msra.mxu0 0
    %304 = vmatprep.subr.bf16.mxu0 0
    %305 = vmatpush1.bf16.msra.mxu0 0
    %306 = vmatprep.subr.bf16.mxu0 0
    %307 = vmatpush1.bf16.msra.mxu0 0
    %308 = vmatprep.subr.bf16.mxu0 0
    %309 = vmatpush1.bf16.msra.mxu0 0
    %310 = vmatprep.subr.bf16.mxu0 0
    %311 = vmatpush1.bf16.msra.mxu0 0
    %312 = vmatprep.subr.bf16.mxu0 0
    %313 = vmatpush1.bf16.msra.mxu0 0
    %314 = vmatprep.mubr.bf16.mxu0 0
    %315 = vmatmul.mubr.bf16.gmra.mrb[0].mxu0 %v89
    %v316 = vpop.f32.mrb[0].mxu0
    %v317 = vadd.f32 0.0, %v316
    %v318 = vpop.f32.mrb[0].mxu0
    %v319 = vadd.f32 0.0, %v318
    %v320 = vpop.f32.mrb[0].mxu0
    %v321 = vpop.f32.mrb[0].mxu0
    %322 = vdwg.mxu0
    %323 = vmatprep.subr.bf16.mxu0 %v221
    %324 = vmatpush1.bf16.msra.mxu0 %v220
    %325 = vmatprep.subr.bf16.mxu0 %v225
    %326 = vmatpush1.bf16.msra.mxu0 %v224
    %327 = vmatprep.subr.bf16.mxu0 %v229
    %328 = vmatpush1.bf16.msra.mxu0 %v228
    %329 = vmatprep.subr.bf16.mxu0 %v233
    %330 = vmatpush1.bf16.msra.mxu0 %v232
    %331 = vmatprep.subr.bf16.mxu0 %v237
    %332 = vmatpush1.bf16.msra.mxu0 %v236
    %333 = vmatprep.subr.bf16.mxu0 %v241
    %334 = vmatpush1.bf16.msra.mxu0 %v240
    %335 = vmatprep.subr.bf16.mxu0 %v245
    %336 = vmatpush1.bf16.msra.mxu0 %v244
    %337 = vmatprep.subr.bf16.mxu0 %v249
    %338 = vmatpush1.bf16.msra.mxu0 %v248
    %339 = vmatprep.subr.bf16.mxu0 0
    %340 = vmatpush1.bf16.msra.mxu0 0
    %341 = vmatprep.subr.bf16.mxu0 0
    %342 = vmatpush1.bf16.msra.mxu0 0
    %343 = vmatprep.subr.bf16.mxu0 0
    %344 = vmatpush1.bf16.msra.mxu0 0
    %345 = vmatprep.subr.bf16.mxu0 0
    %346 = vmatpush1.bf16.msra.mxu0 0
    %347 = vmatprep.subr.bf16.mxu0 0
    %348 = vmatpush1.bf16.msra.mxu0 0
    %349 = vmatprep.subr.bf16.mxu0 0
    %350 = vmatpush1.bf16.msra.mxu0 0
    %351 = vmatprep.subr.bf16.mxu0 0
    %352 = vmatpush1.bf16.msra.mxu0 0
    %353 = vmatprep.subr.bf16.mxu0 0
    %354 = vmatpush1.bf16.msra.mxu0 0
    %355 = vmatprep.mubr.bf16.mxu0 0
    %356 = vmatmul.mubr.bf16.gmra.mrb[0].mxu0 %v89
    %v357 = vpop.f32.mrb[0].mxu0
    %v358 = vadd.f32 0.0, %v357
    %v359 = vpop.f32.mrb[0].mxu0
    %v360 = vadd.f32 0.0, %v359
    %v361 = vpop.f32.mrb[0].mxu0
    %v362 = vpop.f32.mrb[0].mxu0
    %363 = vdwg.mxu0
    %v396 = vunpack.c.l.b16 %v56
    %v397 = vunpack.c.h.b16 %v56
    %v398 = vunpack.c.l.b16 %v57
    %v399 = vunpack.c.h.b16 %v57
    %v400 = vunpack.c.l.b16 %v58
    %v401 = vunpack.c.h.b16 %v58
    %v402 = vunpack.c.l.b16 %v59
    %v403 = vunpack.c.h.b16 %v59
    %v404 = vunpack.c.l.b16 %v60
    %v405 = vunpack.c.h.b16 %v60
    %v406 = vunpack.c.l.b16 %v61
    %v407 = vunpack.c.h.b16 %v61
    %v408 = vunpack.c.l.b16 %v62
    %v409 = vunpack.c.h.b16 %v62
    %v410 = vunpack.c.l.b16 %v63
    %v411 = vunpack.c.h.b16 %v63
    %v412 = vunpack.c.l.b16 %v64
    %v413 = vunpack.c.h.b16 %v64
    %v414 = vunpack.c.l.b16 %v65
    %v415 = vunpack.c.h.b16 %v65
    %v416 = vunpack.c.l.b16 %v66
    %v417 = vunpack.c.h.b16 %v66
    %v418 = vunpack.c.l.b16 %v67
    %v419 = vunpack.c.h.b16 %v67
    %v420 = vunpack.c.l.b16 %v68
    %v421 = vunpack.c.h.b16 %v68
    %v422 = vunpack.c.l.b16 %v69
    %v423 = vunpack.c.h.b16 %v69
    %v424 = vunpack.c.l.b16 %v70
    %v425 = vunpack.c.h.b16 %v70
    %v426 = vunpack.c.l.b16 %v71
    %v427 = vunpack.c.h.b16 %v71
    %v428 = vunpack.c.l.b16 %v72
    %v429 = vunpack.c.h.b16 %v72
    %v430 = vunpack.c.l.b16 %v73
    %v431 = vunpack.c.h.b16 %v73
    %v432 = vunpack.c.l.b16 %v74
    %v433 = vunpack.c.h.b16 %v74
    %v434 = vunpack.c.l.b16 %v75
    %v435 = vunpack.c.h.b16 %v75
    %v436 = vunpack.c.l.b16 %v76
    %v437 = vunpack.c.h.b16 %v76
    %v438 = vunpack.c.l.b16 %v77
    %v439 = vunpack.c.h.b16 %v77
    %v440 = vunpack.c.l.b16 %v78
    %v441 = vunpack.c.h.b16 %v78
    %v442 = vunpack.c.l.b16 %v79
    %v443 = vunpack.c.h.b16 %v79
    %v444 = vunpack.c.l.b16 %v80
    %v445 = vunpack.c.h.b16 %v80
    %v446 = vunpack.c.l.b16 %v81
    %v447 = vunpack.c.h.b16 %v81
    %v448 = vunpack.c.l.b16 %v82
    %v449 = vunpack.c.h.b16 %v82
    %v450 = vunpack.c.l.b16 %v83
    %v451 = vunpack.c.h.b16 %v83
    %v452 = vunpack.c.l.b16 %v84
    %v453 = vunpack.c.h.b16 %v84
    %v454 = vunpack.c.l.b16 %v85
    %v455 = vunpack.c.h.b16 %v85
    %v456 = vunpack.c.l.b16 %v86
    %v457 = vunpack.c.h.b16 %v86
    %v458 = vunpack.c.l.b16 %v87
    %v459 = vunpack.c.h.b16 %v87
    %v460 = vpack.c.b16 %v400, %v396
    %v461 = vpack.c.b16 %v401, %v397
    %v462 = vpack.c.b16 %v402, %v398
    %v463 = vpack.c.b16 %v403, %v399
    %v464 = vpack.c.b16 %v408, %v404
    %v465 = vpack.c.b16 %v409, %v405
    %v466 = vpack.c.b16 %v410, %v406
    %v467 = vpack.c.b16 %v411, %v407
    %v468 = vpack.c.b16 %v416, %v412
    %v469 = vpack.c.b16 %v417, %v413
    %v470 = vpack.c.b16 %v418, %v414
    %v471 = vpack.c.b16 %v419, %v415
    %v472 = vpack.c.b16 %v424, %v420
    %v473 = vpack.c.b16 %v425, %v421
    %v474 = vpack.c.b16 %v426, %v422
    %v475 = vpack.c.b16 %v427, %v423
    %v476 = vpack.c.b16 %v432, %v428
    %v477 = vpack.c.b16 %v433, %v429
    %v478 = vpack.c.b16 %v434, %v430
    %v479 = vpack.c.b16 %v435, %v431
    %v480 = vpack.c.b16 %v440, %v436
    %v481 = vpack.c.b16 %v441, %v437
    %v482 = vpack.c.b16 %v442, %v438
    %v483 = vpack.c.b16 %v443, %v439
    %v484 = vpack.c.b16 %v448, %v444
    %v485 = vpack.c.b16 %v449, %v445
    %v486 = vpack.c.b16 %v450, %v446
    %v487 = vpack.c.b16 %v451, %v447
    %v488 = vpack.c.b16 %v456, %v452
    %v489 = vpack.c.b16 %v457, %v453
    %v490 = vpack.c.b16 %v458, %v454
    %v491 = vpack.c.b16 %v459, %v455
    %524 = vmatprep.subr.bf16.mxu0 %v461
    %525 = vmatpush1.bf16.msra.mxu0 %v460
    %526 = vmatprep.subr.bf16.mxu0 %v465
    %527 = vmatpush1.bf16.msra.mxu0 %v464
    %528 = vmatprep.subr.bf16.mxu0 %v469
    %529 = vmatpush1.bf16.msra.mxu0 %v468
    %530 = vmatprep.subr.bf16.mxu0 %v473
    %531 = vmatpush1.bf16.msra.mxu0 %v472
    %532 = vmatprep.subr.bf16.mxu0 %v477
    %533 = vmatpush1.bf16.msra.mxu0 %v476
    %534 = vmatprep.subr.bf16.mxu0 %v481
    %535 = vmatpush1.bf16.msra.mxu0 %v480
    %536 = vmatprep.subr.bf16.mxu0 %v485
    %537 = vmatpush1.bf16.msra.mxu0 %v484
    %538 = vmatprep.subr.bf16.mxu0 %v489
    %539 = vmatpush1.bf16.msra.mxu0 %v488
    %540 = vmatprep.subr.bf16.mxu0 0
    %541 = vmatpush1.bf16.msra.mxu0 0
    %542 = vmatprep.subr.bf16.mxu0 0
    %543 = vmatpush1.bf16.msra.mxu0 0
    %544 = vmatprep.subr.bf16.mxu0 0
    %545 = vmatpush1.bf16.msra.mxu0 0
    %546 = vmatprep.subr.bf16.mxu0 0
    %547 = vmatpush1.bf16.msra.mxu0 0
    %548 = vmatprep.subr.bf16.mxu0 0
    %549 = vmatpush1.bf16.msra.mxu0 0
    %550 = vmatprep.subr.bf16.mxu0 0
    %551 = vmatpush1.bf16.msra.mxu0 0
    %552 = vmatprep.subr.bf16.mxu0 0
    %553 = vmatpush1.bf16.msra.mxu0 0
    %554 = vmatprep.subr.bf16.mxu0 0
    %555 = vmatpush1.bf16.msra.mxu0 0
    %556 = vmatprep.mubr.bf16.mxu0 0
    %557 = vmatmul.mubr.bf16.gmra.mrb[0].mxu0 %v55
    %v558 = vpop.f32.mrb[0].mxu0
    %v559 = vadd.f32 %v317, %v558
    %v560 = vpop.f32.mrb[0].mxu0
    %v561 = vadd.f32 %v319, %v560
    %v562 = vpop.f32.mrb[0].mxu0
    %v563 = vpop.f32.mrb[0].mxu0
    %564 = vdwg.mxu0
    %565 = vmatprep.subr.bf16.mxu0 %v463
    %566 = vmatpush1.bf16.msra.mxu0 %v462
    %567 = vmatprep.subr.bf16.mxu0 %v467
    %568 = vmatpush1.bf16.msra.mxu0 %v466
    %569 = vmatprep.subr.bf16.mxu0 %v471
    %570 = vmatpush1.bf16.msra.mxu0 %v470
    %571 = vmatprep.subr.bf16.mxu0 %v475
    %572 = vmatpush1.bf16.msra.mxu0 %v474
    %573 = vmatprep.subr.bf16.mxu0 %v479
    %574 = vmatpush1.bf16.msra.mxu0 %v478
    %575 = vmatprep.subr.bf16.mxu0 %v483
    %576 = vmatpush1.bf16.msra.mxu0 %v482
    %577 = vmatprep.subr.bf16.mxu0 %v487
    %578 = vmatpush1.bf16.msra.mxu0 %v486
    %579 = vmatprep.subr.bf16.mxu0 %v491
    %580 = vmatpush1.bf16.msra.mxu0 %v490
    %581 = vmatprep.subr.bf16.mxu0 0
    %582 = vmatpush1.bf16.msra.mxu0 0
    %583 = vmatprep.subr.bf16.mxu0 0
    %584 = vmatpush1.bf16.msra.mxu0 0
    %585 = vmatprep.subr.bf16.mxu0 0
    %586 = vmatpush1.bf16.msra.mxu0 0
    %587 = vmatprep.subr.bf16.mxu0 0
    %588 = vmatpush1.bf16.msra.mxu0 0
    %589 = vmatprep.subr.bf16.mxu0 0
    %590 = vmatpush1.bf16.msra.mxu0 0
    %591 = vmatprep.subr.bf16.mxu0 0
    %592 = vmatpush1.bf16.msra.mxu0 0
    %593 = vmatprep.subr.bf16.mxu0 0
    %594 = vmatpush1.bf16.msra.mxu0 0
    %595 = vmatprep.subr.bf16.mxu0 0
    %596 = vmatpush1.bf16.msra.mxu0 0
    %597 = vmatprep.mubr.bf16.mxu0 0
    %598 = vmatmul.mubr.bf16.gmra.mrb[0].mxu0 %v55
    %v599 = vpop.f32.mrb[0].mxu0
    %v600 = vadd.f32 %v358, %v599
    %v601 = vpop.f32.mrb[0].mxu0
    %v602 = vadd.f32 %v360, %v601
    %v603 = vpop.f32.mrb[0].mxu0
    %v604 = vpop.f32.mrb[0].mxu0
    %605 = vdwg.mxu0
    %v606 = vld [vmem:[%s5] sm:$0xf]
    %v608 = vlaneseq
    %v609 = vshrl.u32 %v608, 7
    %v610 = vsub.s32 0, %v609
    %v611 = vrot.slane %v606, %v610
    %v612 = vlaneseq
    %v613 = vshrl.u32 %v612, 7
    %v614 = vsub.s32 1, %v613
    %v615 = vrot.slane %v606, %v614
    %v616 = vlaneseq
    %v617 = vshrl.u32 %v616, 7
    %v618 = vsub.s32 2, %v617
    %v619 = vrot.slane %v606, %v618
    %v620 = vlaneseq
    %v621 = vshrl.u32 %v620, 7
    %v622 = vsub.s32 3, %v621
    %v623 = vrot.slane %v606, %v622
    %v628 = vadd.f32 %v559, %v611
    %v629 = vadd.f32 %v561, %v615
    %v630 = vadd.f32 %v600, %v619
    %v631 = vadd.f32 %v602, %v623
    %v632 = vmul.f32 %v628, 0.5
    %v633 = vtanh.pop %v632
    %v634 = vadd.f32 %v633, 1.0
    %v635 = vmul.f32 %v634, 0.5
    %v636 = vmul.f32 %v629, 0.5
    %v637 = vtanh.pop %v636
    %v638 = vadd.f32 %v637, 1.0
    %v639 = vmul.f32 %v638, 0.5
    %v640 = vtanh.pop %v630
    %v641 = vmul.f32 %v631, 0.5
    %v642 = vtanh.pop %v641
    %v643 = vadd.f32 %v642, 1.0
    %v644 = vmul.f32 %v643, 0.5
    %v645 = vld [vmem:[%s2] sm:$0xff]
    %v646 = vmul.f32 %v639, %v645
    %v647 = vmul.f32 %v635, %v640
    %v648 = vadd.f32 %v646, %v647
    %v649 = vtanh.pop %v648
    %v650 = vmul.f32 %v644, %v649
    %651 = vst [vmem:[%s6] sm:$0xff] %v650
    %652 = vst [vmem:[%s7] sm:$0xff] %v648
    // Predicated region
    $region34: #{_rnn_step.1} parent=1 // pred_check
      _
    $region35: #{_rnn_step.1} parent=1 // pred_check_branch
      %654 = sbr.rel (0) target = $region37
    $region36: #{_rnn_step.1} parent=1 // pred_region
      _
    $region37: #{_rnn_step.1} parent=1 // pred_fallthru
      _
    // Predicated region
    $region38: #{_rnn_step.1} parent=1 // pred_check
      _
    $region39: #{_rnn_step.1} parent=1 // pred_check_branch
      %656 = sbr.rel (0) target = $region41
    $region40: #{_rnn_step.1} parent=1 // pred_region
      _
    $region41: #{_rnn_step.1} parent=1 // pred_fallthru
      _
    // Predicated region
    $region42: #{_rnn_step.1} parent=1 // pred_check
      _
    $region43: #{_rnn_step.1} parent=1 // pred_check_branch
      %658 = sbr.rel (0) target = $region45
    $region44: #{_rnn_step.1} parent=1 // pred_region
      _
    $region45: #{_rnn_step.1} parent=1 // pred_fallthru
      _
    // Predicated region
    $region46: #{_rnn_step.1} parent=1 // pred_check
      _
    $region47: #{_rnn_step.1} parent=1 // pred_check_branch
      %660 = sbr.rel (0) target = $region49
    $region48: #{_rnn_step.1} parent=1 // pred_region
      _
    $region49: #{_rnn_step.1} parent=1 // pred_fallthru
      _
    %661 = vsyncpa [#allocation3], 1
    %662 = vsyncpa [#allocation5], 1

</llo_original>
